<compile_context>
chip_gen: v6e
topology: v6e:2x2x1
jax: 0.10.0
libtpu: 0.0.40
codegen_flags: <defaults>
</compile_context>

<pallas_src>
import functools

import jax
import jax.numpy as jnp
from jax.experimental import pallas as pl
from jax.experimental.pallas import tpu as pltpu

LANE = 128


def _round_up(n: int, m: int) -> int:
    return (n + m - 1) // m * m


def _cdiv(a: int, b: int) -> int:
    return (a + b - 1) // b


def larp_mlp_kernel(x_ref, w1_ref, b1_ref, w2_ref, b2_ref, w3_ref, b3_ref,
                    out_ref):
    """Fused MLP tile: relu(relu(x@W1+b1)@W2+b2) · w3 + b3 -> (1, TM) row."""
    # In-kernel f32 -> bf16 cast of the streamed x tile (VPU has slack; this
    # replaces the wrapper-side pad+cast HBM pass).
    x = x_ref[...].astype(jnp.bfloat16)                              # [TM, D]

    # Layer 1: bf16 MXU, f32 accumulate; bias + ReLU in f32; single assignment
    # casts straight to bf16 so only the bf16 copy is live across the boundary.
    h1 = jnp.dot(x, w1_ref[...], preferred_element_type=jnp.float32)
    h1 = jnp.maximum(h1 + b1_ref[...], 0.0).astype(jnp.bfloat16)     # [TM, H1p]

    # Layer 2: same pattern.
    h2 = jnp.dot(h1, w2_ref[...], preferred_element_type=jnp.float32)
    h2 = jnp.maximum(h2 + b2_ref[...], 0.0).astype(jnp.bfloat16)     # [TM, H2p]

    # Output head (out_dim == 1): contract w3_row [1,H2p] with h2 [TM,H2p]
    # along H2p.  Produces the batch results directly as a lane-dense [1, TM]
    # row (no (TM,1) masked-store column, no fine-grained output DMA).
    row = jax.lax.dot_general(
        w3_ref[...], h2,
        dimension_numbers=(((1,), (1,)), ((), ())),
        preferred_element_type=jnp.float32)                          # [1, TM]

    out_ref[...] = (row + b3_ref[0, 0]).astype(out_ref.dtype)


def prepare_params(params):
    """One-time layout prep: pad hidden dims to 128 lanes, cast matmul
    operands to bf16, keep biases f32, store w3 as a [1, H2p] row.

    The padded rows/cols of W1/W2/W3 and padded entries of b1/b2 are exactly
    zero, so relu(0+0)=0 flows through and the padding provably does not
    change the result."""
    h1 = params["w1"].shape[1]
    h2 = params["w2"].shape[1]
    h1p = _round_up(h1, LANE)
    h2p = _round_up(h2, LANE)

    def pad_cols(a, n):
        return jnp.pad(a, ((0, 0), (0, n - a.shape[1])))

    w1 = pad_cols(params["w1"], h1p).astype(jnp.bfloat16)            # [D,  H1p]
    b1 = pad_cols(params["b1"], h1p).astype(jnp.float32)             # [1,  H1p]
    w2 = jnp.pad(params["w2"],
                 ((0, h1p - params["w2"].shape[0]),
                  (0, h2p - params["w2"].shape[1]))).astype(jnp.bfloat16)
    b2 = pad_cols(params["b2"], h2p).astype(jnp.float32)             # [1,  H2p]
    w3 = pad_cols(params["w3"].T, h2p).astype(jnp.bfloat16)          # [1,  H2p]
    b3 = params["b3"].astype(jnp.float32)                            # [1,  1]
    return dict(w1=w1, b1=b1, w2=w2, b2=b2, w3=w3, b3=b3)


@functools.partial(jax.jit, static_argnames=("block_m",))
def larp_mlp_forward(x, prepared, *, block_m=2048):
    """Forward pass.

    Args:
      x: [B, input_dim] float32 (passed straight to the kernel; no wrapper
         pad/cast HBM pass).
      prepared: output of prepare_params.
      block_m: max batch tile (rounded to a multiple of 128).  The default
               2048 keeps per-step state at a few MiB -- far under the scoped
               VMEM budget on v5e/v6e and under v7x's 64 MiB physical VMEM --
               while amortising the ~0.35 us per-grid-step overhead; 4096 is
               also safe if B is large.
    Returns:
      [B, 1] float32 predicted reward.
    """
    B, D = x.shape
    w1, b1, w2, b2, w3, b3 = (prepared[k]
                              for k in ("w1", "b1", "w2", "b2", "w3", "b3"))
    H1p = w1.shape[1]
    H2p = w2.shape[1]

    block_m = max(LANE, _round_up(int(block_m), LANE))
    rows128 = _round_up(B, LANE)
    num_tiles = _cdiv(B, block_m)
    # v7x megacore: ensure >=2 steps on the "parallel" batch axis whenever
    # there is enough work, so both TensorCores get a share.
    if num_tiles == 1 and rows128 >= 2 * LANE:
        num_tiles = 2
    # Balanced tiles: padding waste is < 128 rows per tile.
    TM = _round_up(_cdiv(rows128, num_tiles), LANE)
    Bp = TM * num_tiles

    flops = 2 * Bp * (D * H1p + H1p * H2p + H2p)
    bytes_accessed = (x.size * 4 + Bp * 4
                      + (w1.size + w2.size + w3.size) * 2
                      + (b1.size + b2.size + b3.size) * 4)

    out = pl.pallas_call(
        larp_mlp_kernel,
        out_shape=jax.ShapeDtypeStruct((1, Bp), jnp.float32),
        grid=(num_tiles,),
        in_specs=[
            pl.BlockSpec((TM, D), lambda i: (i, 0)),        # x tile (streamed)
            pl.BlockSpec((D, H1p), lambda i: (0, 0)),       # W1 (VMEM-resident)
            pl.BlockSpec((1, H1p), lambda i: (0, 0)),       # b1
            pl.BlockSpec((H1p, H2p), lambda i: (0, 0)),     # W2
            pl.BlockSpec((1, H2p), lambda i: (0, 0)),       # b2
            pl.BlockSpec((1, H2p), lambda i: (0, 0)),       # w3 row
            pl.BlockSpec(memory_space=pltpu.MemorySpace.SMEM),  # b3 scalar
        ],
        out_specs=pl.BlockSpec((1, TM), lambda i: (0, i)),  # lane-dense row
        compiler_params=pltpu.CompilerParams(
            dimension_semantics=("parallel",),
            vmem_limit_bytes=32 << 20),
        cost_estimate=pl.CostEstimate(
            flops=flops, transcendentals=0, bytes_accessed=bytes_accessed),
    )(x, w1, b1, w2, b2, w3, b3)

    return out[0, :B].reshape(B, 1)


def init_params(key, input_dim, hidden_dims):
    """Deterministic Kaiming-uniform-style init (matches nn.Linear defaults in
    spirit; synthetic weights, not a checkpoint). Weights stored [in, out]."""
    dims = [input_dim] + list(hidden_dims) + [1]
    params = {}
    for i in range(len(dims) - 1):
        d_in, d_out = dims[i], dims[i + 1]
        key, kw, kb = jax.random.split(key, 3)
        bound = 1.0 / jnp.sqrt(float(d_in))
        params[f"w{i + 1}"] = jax.random.uniform(
            kw, (d_in, d_out), jnp.float32, minval=-bound, maxval=bound)
        params[f"b{i + 1}"] = jax.random.uniform(
            kb, (1, d_out), jnp.float32, minval=-bound, maxval=bound)
    return params


def reference_forward(x, params):
    """Pure-JAX f32 reference (PyTorch-equivalent semantics)."""
    h = jnp.maximum(x @ params["w1"] + params["b1"], 0.0)
    h = jnp.maximum(h @ params["w2"] + params["b2"], 0.0)
    return h @ params["w3"] + params["b3"]


if __name__ == "__main__":
    # Small shapes consistent with the module:
    #   x = concat([encoded_s_t, predicted_s_t_plus_1_flat, action_embedding])
    batch = 8
    input_dim = 32
    hidden_dims = [64, 32]

    key = jax.random.PRNGKey(0)
    key, kx, kx2 = jax.random.split(key, 3)
    x = jax.random.normal(kx, (batch, input_dim), jnp.float32)

    params = init_params(key, input_dim, hidden_dims)
    prepared = prepare_params(params)

    # Single-tile path (B < 128).
    out = jax.block_until_ready(larp_mlp_forward(x, prepared))
    ref = reference_forward(x, params)
    assert out.shape == (batch, 1), out.shape
    # bf16 matmul operands => looser tolerance than the pure-f32 version.
    assert jnp.allclose(out, ref, atol=5e-2, rtol=5e-2), (
        f"mismatch: max abs err {jnp.max(jnp.abs(out - ref))}")

    # Multi-tile path: B not a multiple of 128, exercises the 2-tile megacore
    # split, balanced TM selection, and the unpadded partial final x block.
    x2 = jax.random.normal(kx2, (300, input_dim), jnp.float32)
    out2 = jax.block_until_ready(larp_mlp_forward(x2, prepared))
    ref2 = reference_forward(x2, params)
    assert out2.shape == (300, 1), out2.shape
    assert jnp.allclose(out2, ref2, atol=5e-2, rtol=5e-2), (
        f"mismatch: max abs err {jnp.max(jnp.abs(out2 - ref2))}")

    print("KERNEL_OK")
</pallas_src>

<mosaic_0001>
module attributes {stable_mosaic.version = 11 : i64} {
  func.func @larp_mlp_kernel(%arg0: i32, %arg1: memref<128x32xf32, #tpu.memory_space<vmem>>, %arg2: memref<32x128xbf16, #tpu.memory_space<vmem>>, %arg3: memref<1x128xf32, #tpu.memory_space<vmem>>, %arg4: memref<128x128xbf16, #tpu.memory_space<vmem>>, %arg5: memref<1x128xf32, #tpu.memory_space<vmem>>, %arg6: memref<1x128xbf16, #tpu.memory_space<vmem>>, %arg7: memref<1x1xf32, #tpu.memory_space<smem>>, %arg8: memref<1x128xf32, #tpu.memory_space<vmem>>) attributes {dimension_semantics = [#tpu.dimension_semantics<parallel>], iteration_bounds = array<i64: 1>, scalar_prefetch = 0 : i64, scratch_operands = 0 : i64, tpu.core_type = #tpu.core_type<tc>, window_params = [{transform_indices = @transform_0, window_bounds = array<i64: 128, 32>}, {pipeline_mode = #tpu.pipeline_mode<synchronous>, transform_indices = @transform_1, window_bounds = array<i64: 32, 128>}, {pipeline_mode = #tpu.pipeline_mode<synchronous>, transform_indices = @transform_2, window_bounds = array<i64: 1, 128>}, {pipeline_mode = #tpu.pipeline_mode<synchronous>, transform_indices = @transform_3, window_bounds = array<i64: 128, 128>}, {pipeline_mode = #tpu.pipeline_mode<synchronous>, transform_indices = @transform_4, window_bounds = array<i64: 1, 128>}, {pipeline_mode = #tpu.pipeline_mode<synchronous>, transform_indices = @transform_5, window_bounds = array<i64: 1, 128>}, {transform_indices = @transform_6, window_bounds = array<i64: 1, 1>}, {transform_indices = @transform_7, window_bounds = array<i64: 1, 128>}]} {
    %c0 = arith.constant 0 : index
    %c0_0 = arith.constant 0 : index
    %0 = vector.load %arg1[%c0, %c0_0] : memref<128x32xf32, #tpu.memory_space<vmem>>, vector<128x32xf32>
    %1 = arith.truncf %0 : vector<128x32xf32> to vector<128x32xbf16>
    %c0_1 = arith.constant 0 : index
    %c0_2 = arith.constant 0 : index
    %2 = vector.load %arg2[%c0_1, %c0_2] : memref<32x128xbf16, #tpu.memory_space<vmem>>, vector<32x128xbf16>
    %cst = arith.constant dense<0.000000e+00> : vector<128x128xf32>
    %3 = tpu.matmul %1, %2, %cst {dimension_numbers = #tpu.dot_dimension_numbers<[1], [0], [0], [1], [0, 0, 1, 1], [], []>} : vector<128x32xbf16>, vector<32x128xbf16>, vector<128x128xf32> -> vector<128x128xf32>
    %c0_3 = arith.constant 0 : index
    %c0_4 = arith.constant 0 : index
    %4 = vector.load %arg3[%c0_3, %c0_4] : memref<1x128xf32, #tpu.memory_space<vmem>>, vector<1x128xf32>
    %5 = vector.broadcast %4 : vector<1x128xf32> to vector<128x128xf32>
    %6 = arith.addf %3, %5 : vector<128x128xf32>
    %cst_5 = arith.constant 0.000000e+00 : f32
    %7 = vector.broadcast %cst_5 : f32 to vector<128x128xf32>
    %8 = arith.maximumf %6, %7 : vector<128x128xf32>
    %9 = arith.truncf %8 : vector<128x128xf32> to vector<128x128xbf16>
    %c0_6 = arith.constant 0 : index
    %c0_7 = arith.constant 0 : index
    %10 = vector.load %arg4[%c0_6, %c0_7] : memref<128x128xbf16, #tpu.memory_space<vmem>>, vector<128x128xbf16>
    %cst_8 = arith.constant dense<0.000000e+00> : vector<128x128xf32>
    %11 = tpu.matmul %9, %10, %cst_8 {dimension_numbers = #tpu.dot_dimension_numbers<[1], [0], [0], [1], [0, 0, 1, 1], [], []>} : vector<128x128xbf16>, vector<128x128xbf16>, vector<128x128xf32> -> vector<128x128xf32>
    %c0_9 = arith.constant 0 : index
    %c0_10 = arith.constant 0 : index
    %12 = vector.load %arg5[%c0_9, %c0_10] : memref<1x128xf32, #tpu.memory_space<vmem>>, vector<1x128xf32>
    %13 = vector.broadcast %12 : vector<1x128xf32> to vector<128x128xf32>
    %14 = arith.addf %11, %13 : vector<128x128xf32>
    %cst_11 = arith.constant 0.000000e+00 : f32
    %15 = vector.broadcast %cst_11 : f32 to vector<128x128xf32>
    %16 = arith.maximumf %14, %15 : vector<128x128xf32>
    %17 = arith.truncf %16 : vector<128x128xf32> to vector<128x128xbf16>
    %c0_12 = arith.constant 0 : index
    %c0_13 = arith.constant 0 : index
    %18 = vector.load %arg6[%c0_12, %c0_13] : memref<1x128xbf16, #tpu.memory_space<vmem>>, vector<1x128xbf16>
    %cst_14 = arith.constant dense<0.000000e+00> : vector<1x128xf32>
    %19 = tpu.matmul %18, %17, %cst_14 {dimension_numbers = #tpu.dot_dimension_numbers<[1], [1], [0], [0], [0, 0, 1, 0], [], []>} : vector<1x128xbf16>, vector<128x128xbf16>, vector<1x128xf32> -> vector<1x128xf32>
    %c0_15 = arith.constant 0 : index
    %c0_16 = arith.constant 0 : index
    %20 = memref.load %arg7[%c0_15, %c0_16] : memref<1x1xf32, #tpu.memory_space<smem>>
    %21 = vector.broadcast %20 : f32 to vector<1x128xf32>
    %22 = arith.addf %19, %21 : vector<1x128xf32>
    %c0_17 = arith.constant 0 : index
    %c0_18 = arith.constant 0 : index
    %23 = vector.load %arg8[%c0_17, %c0_18] : memref<1x128xf32, #tpu.memory_space<vmem>>, vector<1x128xf32>
    tpu.vector_store %arg8[%c0_17, %c0_18], %22 {strides = array<i32>} : memref<1x128xf32, #tpu.memory_space<vmem>>, vector<1x128xf32>,
    return
  }
  func.func @transform_0(%arg0: i32) -> (i32, i32) {
    %c0_i32 = arith.constant 0 : i32
    %c0_i32_0 = arith.constant 0 : i32
    return %arg0, %c0_i32 : i32, i32
  }
  func.func @transform_1(%arg0: i32) -> (i32, i32) {
    %c0_i32 = arith.constant 0 : i32
    %c0_i32_0 = arith.constant 0 : i32
    %c0_i32_1 = arith.constant 0 : i32
    return %c0_i32, %c0_i32_0 : i32, i32
  }
  func.func @transform_2(%arg0: i32) -> (i32, i32) {
    %c0_i32 = arith.constant 0 : i32
    %c0_i32_0 = arith.constant 0 : i32
    %c0_i32_1 = arith.constant 0 : i32
    return %c0_i32, %c0_i32_0 : i32, i32
  }
  func.func @transform_3(%arg0: i32) -> (i32, i32) {
    %c0_i32 = arith.constant 0 : i32
    %c0_i32_0 = arith.constant 0 : i32
    %c0_i32_1 = arith.constant 0 : i32
    return %c0_i32, %c0_i32_0 : i32, i32
  }
  func.func @transform_4(%arg0: i32) -> (i32, i32) {
    %c0_i32 = arith.constant 0 : i32
    %c0_i32_0 = arith.constant 0 : i32
    %c0_i32_1 = arith.constant 0 : i32
    return %c0_i32, %c0_i32_0 : i32, i32
  }
  func.func @transform_5(%arg0: i32) -> (i32, i32) {
    %c0_i32 = arith.constant 0 : i32
    %c0_i32_0 = arith.constant 0 : i32
    %c0_i32_1 = arith.constant 0 : i32
    return %c0_i32, %c0_i32_0 : i32, i32
  }
  func.func @transform_6(%arg0: i32) -> (i32, i32) {
    %c0_i32 = arith.constant 0 : i32
    %c0_i32_0 = arith.constant 0 : i32
    %c0_i32_1 = arith.constant 0 : i32
    return %c0_i32, %c0_i32_0 : i32, i32
  }
  func.func @transform_7(%arg0: i32) -> (i32, i32) {
    %c0_i32 = arith.constant 0 : i32
    %c0_i32_0 = arith.constant 0 : i32
    return %c0_i32, %arg0 : i32, i32
  }
}

</mosaic_0001>

<llo_original>
// kernel: larp_mlp_forward.1
$region0: #{larp_mlp_forward.1}
  #allocation0 [shape = 'u32[]', space=smem, size = 0x4, offset = 0x4, fixed_abs, tag = 'smem constant byte address 0x4 - core index']
  #allocation1 [shape = 'u32[144,128]{1,0:T(1,128)}', space=vmem, size = 0x12000, scoped, tag = 'internal scratch']
  #allocation2 [shape = 'f32[1,1]{1,0:T(1,128)S(6)}', space=smem, size = 0x200, scoped, tag = 'scoped memory for larp_mlp_forward.1']
  %s0 = inlined_call_operand.hbm [shape: f32[8,32], index: 0, kind: input, shape index: {}]
  %s1 = inlined_call_operand.hbm [shape: bf16[32,128], index: 1, kind: input, shape index: {}]
  %s2 = inlined_call_operand.vmem [shape: f32[1,128], index: 2, kind: input, shape index: {}]
  %s3 = inlined_call_operand.hbm [shape: bf16[128,128], index: 3, kind: input, shape index: {}]
  %s4 = inlined_call_operand.vmem [shape: f32[1,128], index: 4, kind: input, shape index: {}]
  %s5 = inlined_call_operand.vmem [shape: bf16[1,128], index: 5, kind: input, shape index: {}]
  %s6 = inlined_call_operand.<no memory space> [shape: f32[1,1], index: 6, kind: input, shape index: {}]
  %s7 = inlined_call_operand.vmem [shape: f32[1,128], index: 7, kind: output, shape index: {}]
  %s8 = sld [smem:[#allocation0]]
  $region50: #{larp_mlp_forward.1} parent=0
    _
  %s10 = ssub.s32 1, %s8
  %s11 = scalar_select 0, %s10, %s8
  %12 = sst [smem:[#allocation2]] %s6
  $region1: #{larp_mlp_forward.1} parent=0
    #allocation3 [shape = 'u8[65536]{0}', space=vmem, size = 0x10000, scoped, tag = 'input window, operand 0, single buffered']
    #allocation4 [shape = 's32[1]{0}', space=sflag, size = 0x4, scoped, tag = 'scoped memory for larp_mlp_forward.1']
    #allocation5 [shape = 'u8[8192]{0}', space=vmem, size = 0x2000, scoped, tag = 'input window, operand 1, single buffered']
    #allocation6 [shape = 's32[1]{0}', space=sflag, size = 0x4, scoped, tag = 'scoped memory for larp_mlp_forward.1']
    #allocation7 [shape = 'u8[32768]{0}', space=vmem, size = 0x8000, scoped, tag = 'input window, operand 3, single buffered']
    %13 = vsyncpa [#allocation4], 0
    %14 = vsyncpa [#allocation6], 0
    // Predicated region
    $region2: #{larp_mlp_forward.1} parent=1 // pred_check
      _
    $region3: #{larp_mlp_forward.1} parent=1 // pred_check_branch
      %16 = sbr.rel (0) target = $region5
    $region4: #{larp_mlp_forward.1} parent=1 // pred_region
      %s18 = ssub.s32 2048, 128
      %19 = vsyncadd [#allocation4], %s18
      %s20 = sshll.u32 [#allocation3], 4
      %s21 = int_to_ptr.vmem [resolvable:$true] %s20
      %26 = dma.hbm_to_vmem [thread:$0]  %s0, 128, %s21, [#allocation4], 128, 128, 8
    $region5: #{larp_mlp_forward.1} parent=1 // pred_fallthru
      _
    // Predicated region
    $region6: #{larp_mlp_forward.1} parent=1 // pred_check
      _
    $region7: #{larp_mlp_forward.1} parent=1 // pred_check_branch
      %28 = sbr.rel (0) target = $region9
    $region8: #{larp_mlp_forward.1} parent=1 // pred_region
      %s30 = ssub.s32 256, 256
      %31 = vsyncadd [#allocation6], %s30
      %s32 = sshll.u32 [#allocation5], 4
      %s33 = int_to_ptr.vmem [resolvable:$true] %s32
      %38 = dma.hbm_to_vmem [thread:$0]  %s1, 256, %s33, [#allocation6], 64, 64, 4
    $region9: #{larp_mlp_forward.1} parent=1 // pred_fallthru
      _
    // Predicated region
    $region10: #{larp_mlp_forward.1} parent=1 // pred_check
      _
    $region11: #{larp_mlp_forward.1} parent=1 // pred_check_branch
      %40 = sbr.rel (0) target = $region13
    $region12: #{larp_mlp_forward.1} parent=1 // pred_region
      _
    $region13: #{larp_mlp_forward.1} parent=1 // pred_fallthru
      _
    // Predicated region
    $region14: #{larp_mlp_forward.1} parent=1 // pred_check
      _
    $region15: #{larp_mlp_forward.1} parent=1 // pred_check_branch
      %42 = sbr.rel (0) target = $region17
    $region16: #{larp_mlp_forward.1} parent=1 // pred_region
      %s44 = ssub.s32 1024, 1024
      %45 = vsyncadd [#allocation6], %s44
      %s46 = sshll.u32 [#allocation7], 4
      %s47 = int_to_ptr.vmem [resolvable:$true] %s46
      %52 = dma.hbm_to_vmem [thread:$0]  %s3, 1024, %s47, [#allocation6], 64, 64, 4
    $region17: #{larp_mlp_forward.1} parent=1 // pred_fallthru
      _
    // Predicated region
    $region18: #{larp_mlp_forward.1} parent=1 // pred_check
      _
    $region19: #{larp_mlp_forward.1} parent=1 // pred_check_branch
      %54 = sbr.rel (0) target = $region21
    $region20: #{larp_mlp_forward.1} parent=1 // pred_region
      _
    $region21: #{larp_mlp_forward.1} parent=1 // pred_fallthru
      _
    // Predicated region
    $region22: #{larp_mlp_forward.1} parent=1 // pred_check
      _
    $region23: #{larp_mlp_forward.1} parent=1 // pred_check_branch
      %56 = sbr.rel (0) target = $region25
    $region24: #{larp_mlp_forward.1} parent=1 // pred_region
      _
    $region25: #{larp_mlp_forward.1} parent=1 // pred_fallthru
      _
    // Predicated region
    $region26: #{larp_mlp_forward.1} parent=1 // pred_check
      _
    $region27: #{larp_mlp_forward.1} parent=1 // pred_check_branch
      %58 = sbr.rel (0) target = $region29
    $region28: #{larp_mlp_forward.1} parent=1 // pred_region
      _
    $region29: #{larp_mlp_forward.1} parent=1 // pred_fallthru
      _
    // Predicated region
    $region30: #{larp_mlp_forward.1} parent=1 // pred_check
      _
    $region31: #{larp_mlp_forward.1} parent=1 // pred_check_branch
      %60 = sbr.rel (0) target = $region33
    $region32: #{larp_mlp_forward.1} parent=1 // pred_region
      %61 = dma.done [#allocation4], 2048
    $region33: #{larp_mlp_forward.1} parent=1 // pred_fallthru
      _
    // Predicated region
    $region34: #{larp_mlp_forward.1} parent=1 // pred_check
      _
    $region35: #{larp_mlp_forward.1} parent=1 // pred_check_branch
      %63 = sbr.rel (0) target = $region37
    $region36: #{larp_mlp_forward.1} parent=1 // pred_region
      %64 = dma.done [#allocation6], 256
    $region37: #{larp_mlp_forward.1} parent=1 // pred_fallthru
      _
    // Predicated region
    $region38: #{larp_mlp_forward.1} parent=1 // pred_check
      _
    $region39: #{larp_mlp_forward.1} parent=1 // pred_check_branch
      %66 = sbr.rel (0) target = $region41
    $region40: #{larp_mlp_forward.1} parent=1 // pred_region
      %67 = dma.done [#allocation6], 1024
    $region41: #{larp_mlp_forward.1} parent=1 // pred_fallthru
      _
    %v69 = vld [vmem:[#allocation3] sm:$0xff]
    %v70 = vld [vmem:[#allocation3 + $0x8] sm:$0xff]
    %v71 = vld [vmem:[#allocation3 + $0x10] sm:$0xff]
    %v72 = vld [vmem:[#allocation3 + $0x18] sm:$0xff]
    %v73 = vld [vmem:[#allocation3 + $0x20] sm:$0xff]
    %v74 = vld [vmem:[#allocation3 + $0x28] sm:$0xff]
    %v75 = vld [vmem:[#allocation3 + $0x30] sm:$0xff]
    %v76 = vld [vmem:[#allocation3 + $0x38] sm:$0xff]
    %v77 = vld [vmem:[#allocation3 + $0x40] sm:$0xff]
    %v78 = vld [vmem:[#allocation3 + $0x48] sm:$0xff]
    %v79 = vld [vmem:[#allocation3 + $0x50] sm:$0xff]
    %v80 = vld [vmem:[#allocation3 + $0x58] sm:$0xff]
    %v81 = vld [vmem:[#allocation3 + $0x60] sm:$0xff]
    %v82 = vld [vmem:[#allocation3 + $0x68] sm:$0xff]
    %v83 = vld [vmem:[#allocation3 + $0x70] sm:$0xff]
    %v84 = vld [vmem:[#allocation3 + $0x78] sm:$0xff]
    %v85 = vpack.c.bf16 %v70, %v69
    %v86 = vpack.c.bf16 %v72, %v71
    %v87 = vpack.c.bf16 %v74, %v73
    %v88 = vpack.c.bf16 %v76, %v75
    %v89 = vpack.c.bf16 %v78, %v77
    %v90 = vpack.c.bf16 %v80, %v79
    %v91 = vpack.c.bf16 %v82, %v81
    %v92 = vpack.c.bf16 %v84, %v83
    %v93 = vld [vmem:[#allocation5] sm:$0xf]
    %v94 = vld [vmem:[#allocation5 + $0x4] sm:$0xf]
    %v95 = vld [vmem:[#allocation5 + $0x8] sm:$0xf]
    %v96 = vld [vmem:[#allocation5 + $0xc] sm:$0xf]
    %v97 = vld [vmem:[%s2] sm:$0x1]
    %v99 = vlaneseq
    %v100 = vshrl.u32 %v99, 7
    %v101 = vsub.s32 0, %v100
    %v102 = vrot.slane %v97, %v101
    %v108 = vunpack.c.l.b16 %v93
    %v109 = vunpack.c.l.b16 %v94
    %v110 = vunpack.c.l.b16 %v95
    %v111 = vunpack.c.l.b16 %v96
    %v112 = vpack.c.b16 %v109, %v108
    %v113 = vpack.c.b16 %v111, %v110
    %vm116 = vcmask 261120
    %v118 = vsel %vm116, %v85, 0
    %v121 = vsel %vm116, %v86, 0
    %v124 = vsel %vm116, %v87, 0
    %v127 = vsel %vm116, %v88, 0
    %v130 = vsel %vm116, %v89, 0
    %v133 = vsel %vm116, %v90, 0
    %v136 = vsel %vm116, %v91, 0
    %v139 = vsel %vm116, %v92, 0
    %141 = vmatprep.subr.bf16.mxu0 0
    %142 = vmatpush1.bf16.msra.mxu0 0
    %143 = vmatprep.subr.bf16.mxu0 0
    %144 = vmatpush1.bf16.msra.mxu0 0
    %145 = vmatprep.subr.bf16.mxu0 0
    %146 = vmatpush1.bf16.msra.mxu0 0
    %147 = vmatprep.subr.bf16.mxu0 0
    %148 = vmatpush1.bf16.msra.mxu0 0
    %149 = vmatprep.subr.bf16.mxu0 0
    %150 = vmatpush1.bf16.msra.mxu0 0
    %151 = vmatprep.subr.bf16.mxu0 0
    %152 = vmatpush1.bf16.msra.mxu0 0
    %153 = vmatprep.subr.bf16.mxu0 0
    %154 = vmatpush1.bf16.msra.mxu0 %v113
    %155 = vmatprep.subr.bf16.mxu0 0
    %156 = vmatpush1.bf16.msra.mxu0 %v112
    %157 = vmatprep.subr.bf16.mxu0 0
    %158 = vmatpush2.bf16.msra.mxu0 0
    %159 = vmatprep.subr.bf16.mxu0 0
    %160 = vmatpush2.bf16.msra.mxu0 0
    %161 = vmatprep.subr.bf16.mxu0 0
    %162 = vmatpush2.bf16.msra.mxu0 0
    %163 = vmatprep.subr.bf16.mxu0 0
    %164 = vmatpush2.bf16.msra.mxu0 0
    %165 = vmatprep.subr.bf16.mxu0 0
    %166 = vmatpush2.bf16.msra.mxu0 0
    %167 = vmatprep.subr.bf16.mxu0 0
    %168 = vmatpush2.bf16.msra.mxu0 0
    %169 = vmatprep.subr.bf16.mxu0 0
    %170 = vmatpush2.bf16.msra.mxu0 0
    %171 = vmatprep.subr.bf16.mxu0 0
    %172 = vmatpush2.bf16.msra.mxu0 0
    %173 = vmatprep.mubr.bf16.mxu0 0
    %174 = vmatmul.mubr.bf16.gmra.mxu0 %v118
    %v175 = vpop.f32.mrf.mxu0
    %v176 = vadd.f32 %v102, %v175
    %v177 = vpop.f32.mrf.mxu0
    %v178 = vpop.f32.mrf.mxu0
    %v179 = vadd.f32 %v102, %v178
    %v180 = vpop.f32.mrf.mxu0
    %181 = vmatprep.mubr.bf16.mxu0 0
    %182 = vmatmul.mubr.bf16.gmra.mxu0 %v121
    %v183 = vpop.f32.mrf.mxu0
    %v184 = vadd.f32 %v102, %v183
    %v185 = vpop.f32.mrf.mxu0
    %v186 = vpop.f32.mrf.mxu0
    %v187 = vadd.f32 %v102, %v186
    %v188 = vpop.f32.mrf.mxu0
    %189 = vmatprep.mubr.bf16.mxu0 0
    %190 = vmatmul.mubr.bf16.gmra.mxu0 %v124
    %v191 = vpop.f32.mrf.mxu0
    %v192 = vadd.f32 %v102, %v191
    %v193 = vpop.f32.mrf.mxu0
    %v194 = vpop.f32.mrf.mxu0
    %v195 = vadd.f32 %v102, %v194
    %v196 = vpop.f32.mrf.mxu0
    %197 = vmatprep.mubr.bf16.mxu0 0
    %198 = vmatmul.mubr.bf16.gmra.mxu0 %v127
    %v199 = vpop.f32.mrf.mxu0
    %v200 = vadd.f32 %v102, %v199
    %v201 = vpop.f32.mrf.mxu0
    %v202 = vpop.f32.mrf.mxu0
    %v203 = vadd.f32 %v102, %v202
    %v204 = vpop.f32.mrf.mxu0
    %205 = vmatprep.mubr.bf16.mxu0 0
    %206 = vmatmul.mubr.bf16.gmra.mxu0 %v130
    %v207 = vpop.f32.mrf.mxu0
    %v208 = vadd.f32 %v102, %v207
    %v209 = vpop.f32.mrf.mxu0
    %v210 = vpop.f32.mrf.mxu0
    %v211 = vadd.f32 %v102, %v210
    %v212 = vpop.f32.mrf.mxu0
    %213 = vmatprep.mubr.bf16.mxu0 0
    %214 = vmatmul.mubr.bf16.gmra.mxu0 %v133
    %v215 = vpop.f32.mrf.mxu0
    %v216 = vadd.f32 %v102, %v215
    %v217 = vpop.f32.mrf.mxu0
    %v218 = vpop.f32.mrf.mxu0
    %v219 = vadd.f32 %v102, %v218
    %v220 = vpop.f32.mrf.mxu0
    %221 = vmatprep.mubr.bf16.mxu0 0
    %222 = vmatmul.mubr.bf16.gmra.mxu0 %v136
    %v223 = vpop.f32.mrf.mxu0
    %v224 = vadd.f32 %v102, %v223
    %v225 = vpop.f32.mrf.mxu0
    %v226 = vpop.f32.mrf.mxu0
    %v227 = vadd.f32 %v102, %v226
    %v228 = vpop.f32.mrf.mxu0
    %229 = vmatprep.mubr.bf16.mxu0 0
    %230 = vmatmul.mubr.bf16.gmra.mxu0 %v139
    %v231 = vpop.f32.mrf.mxu0
    %v232 = vadd.f32 %v102, %v231
    %v233 = vpop.f32.mrf.mxu0
    %v234 = vpop.f32.mrf.mxu0
    %v235 = vadd.f32 %v102, %v234
    %v236 = vpop.f32.mrf.mxu0
    %237 = vdwg.mxu0
    %v238 = vmax.f32 %v176, 0.0
    %v239 = vmax.f32 %v179, 0.0
    %v240 = vmax.f32 %v184, 0.0
    %v241 = vmax.f32 %v187, 0.0
    %v242 = vmax.f32 %v192, 0.0
    %v243 = vmax.f32 %v195, 0.0
    %v244 = vmax.f32 %v200, 0.0
    %v245 = vmax.f32 %v203, 0.0
    %v246 = vmax.f32 %v208, 0.0
    %v247 = vmax.f32 %v211, 0.0
    %v248 = vmax.f32 %v216, 0.0
    %v249 = vmax.f32 %v219, 0.0
    %v250 = vmax.f32 %v224, 0.0
    %v251 = vmax.f32 %v227, 0.0
    %v252 = vmax.f32 %v232, 0.0
    %v253 = vmax.f32 %v235, 0.0
    %v254 = vpack.c.bf16 %v239, %v238
    %v255 = vpack.c.bf16 %v241, %v240
    %v256 = vpack.c.bf16 %v243, %v242
    %v257 = vpack.c.bf16 %v245, %v244
    %v258 = vpack.c.bf16 %v247, %v246
    %v259 = vpack.c.bf16 %v249, %v248
    %v260 = vpack.c.bf16 %v251, %v250
    %v261 = vpack.c.bf16 %v253, %v252
    %v262 = vld [vmem:[#allocation7] sm:$0xf]
    %v263 = vld [vmem:[#allocation7 + $0x4] sm:$0xf]
    %v264 = vld [vmem:[#allocation7 + $0x8] sm:$0xf]
    %v265 = vld [vmem:[#allocation7 + $0xc] sm:$0xf]
    %v266 = vld [vmem:[#allocation7 + $0x10] sm:$0xf]
    %v267 = vld [vmem:[#allocation7 + $0x14] sm:$0xf]
    %v268 = vld [vmem:[#allocation7 + $0x18] sm:$0xf]
    %v269 = vld [vmem:[#allocation7 + $0x1c] sm:$0xf]
    %v270 = vld [vmem:[#allocation7 + $0x20] sm:$0xf]
    %v271 = vld [vmem:[#allocation7 + $0x24] sm:$0xf]
    %v272 = vld [vmem:[#allocation7 + $0x28] sm:$0xf]
    %v273 = vld [vmem:[#allocation7 + $0x2c] sm:$0xf]
    %v274 = vld [vmem:[#allocation7 + $0x30] sm:$0xf]
    %v275 = vld [vmem:[#allocation7 + $0x34] sm:$0xf]
    %v276 = vld [vmem:[#allocation7 + $0x38] sm:$0xf]
    %v277 = vld [vmem:[#allocation7 + $0x3c] sm:$0xf]
    %v278 = vld [vmem:[%s4] sm:$0x1]
    %v280 = vlaneseq
    %v281 = vshrl.u32 %v280, 7
    %v282 = vsub.s32 0, %v281
    %v283 = vrot.slane %v278, %v282
    %v301 = vunpack.c.l.b16 %v262
    %v302 = vunpack.c.l.b16 %v263
    %v303 = vunpack.c.l.b16 %v264
    %v304 = vunpack.c.l.b16 %v265
    %v305 = vunpack.c.l.b16 %v266
    %v306 = vunpack.c.l.b16 %v267
    %v307 = vunpack.c.l.b16 %v268
    %v308 = vunpack.c.l.b16 %v269
    %v309 = vunpack.c.l.b16 %v270
    %v310 = vunpack.c.l.b16 %v271
    %v311 = vunpack.c.l.b16 %v272
    %v312 = vunpack.c.l.b16 %v273
    %v313 = vunpack.c.l.b16 %v274
    %v314 = vunpack.c.l.b16 %v275
    %v315 = vunpack.c.l.b16 %v276
    %v316 = vunpack.c.l.b16 %v277
    %v317 = vpack.c.b16 %v302, %v301
    %v318 = vpack.c.b16 %v304, %v303
    %v319 = vpack.c.b16 %v306, %v305
    %v320 = vpack.c.b16 %v308, %v307
    %v321 = vpack.c.b16 %v310, %v309
    %v322 = vpack.c.b16 %v312, %v311
    %v323 = vpack.c.b16 %v314, %v313
    %v324 = vpack.c.b16 %v316, %v315
    %333 = vmatprep.subr.bf16.mxu0 0
    %334 = vmatpush1.bf16.msra.mxu0 %v324
    %335 = vmatprep.subr.bf16.mxu0 0
    %336 = vmatpush1.bf16.msra.mxu0 %v323
    %337 = vmatprep.subr.bf16.mxu0 0
    %338 = vmatpush1.bf16.msra.mxu0 %v322
    %339 = vmatprep.subr.bf16.mxu0 0
    %340 = vmatpush1.bf16.msra.mxu0 %v321
    %341 = vmatprep.subr.bf16.mxu0 0
    %342 = vmatpush1.bf16.msra.mxu0 %v320
    %343 = vmatprep.subr.bf16.mxu0 0
    %344 = vmatpush1.bf16.msra.mxu0 %v319
    %345 = vmatprep.subr.bf16.mxu0 0
    %346 = vmatpush1.bf16.msra.mxu0 %v318
    %347 = vmatprep.subr.bf16.mxu0 0
    %348 = vmatpush1.bf16.msra.mxu0 %v317
    %349 = vmatprep.subr.bf16.mxu0 0
    %350 = vmatpush2.bf16.msra.mxu0 0
    %351 = vmatprep.subr.bf16.mxu0 0
    %352 = vmatpush2.bf16.msra.mxu0 0
    %353 = vmatprep.subr.bf16.mxu0 0
    %354 = vmatpush2.bf16.msra.mxu0 0
    %355 = vmatprep.subr.bf16.mxu0 0
    %356 = vmatpush2.bf16.msra.mxu0 0
    %357 = vmatprep.subr.bf16.mxu0 0
    %358 = vmatpush2.bf16.msra.mxu0 0
    %359 = vmatprep.subr.bf16.mxu0 0
    %360 = vmatpush2.bf16.msra.mxu0 0
    %361 = vmatprep.subr.bf16.mxu0 0
    %362 = vmatpush2.bf16.msra.mxu0 0
    %363 = vmatprep.subr.bf16.mxu0 0
    %364 = vmatpush2.bf16.msra.mxu0 0
    %365 = vmatprep.mubr.bf16.mxu0 0
    %366 = vmatmul.mubr.bf16.gmra.mxu0 %v254
    %v367 = vpop.f32.mrf.mxu0
    %v368 = vadd.f32 %v283, %v367
    %v369 = vpop.f32.mrf.mxu0
    %v370 = vpop.f32.mrf.mxu0
    %v371 = vadd.f32 %v283, %v370
    %v372 = vpop.f32.mrf.mxu0
    %373 = vmatprep.mubr.bf16.mxu0 0
    %374 = vmatmul.mubr.bf16.gmra.mxu0 %v255
    %v375 = vpop.f32.mrf.mxu0
    %v376 = vadd.f32 %v283, %v375
    %v377 = vpop.f32.mrf.mxu0
    %v378 = vpop.f32.mrf.mxu0
    %v379 = vadd.f32 %v283, %v378
    %v380 = vpop.f32.mrf.mxu0
    %381 = vmatprep.mubr.bf16.mxu0 0
    %382 = vmatmul.mubr.bf16.gmra.mxu0 %v256
    %v383 = vpop.f32.mrf.mxu0
    %v384 = vadd.f32 %v283, %v383
    %v385 = vpop.f32.mrf.mxu0
    %v386 = vpop.f32.mrf.mxu0
    %v387 = vadd.f32 %v283, %v386
    %v388 = vpop.f32.mrf.mxu0
    %389 = vmatprep.mubr.bf16.mxu0 0
    %390 = vmatmul.mubr.bf16.gmra.mxu0 %v257
    %v391 = vpop.f32.mrf.mxu0
    %v392 = vadd.f32 %v283, %v391
    %v393 = vpop.f32.mrf.mxu0
    %v394 = vpop.f32.mrf.mxu0
    %v395 = vadd.f32 %v283, %v394
    %v396 = vpop.f32.mrf.mxu0
    %397 = vmatprep.mubr.bf16.mxu0 0
    %398 = vmatmul.mubr.bf16.gmra.mxu0 %v258
    %v399 = vpop.f32.mrf.mxu0
    %v400 = vadd.f32 %v283, %v399
    %v401 = vpop.f32.mrf.mxu0
    %v402 = vpop.f32.mrf.mxu0
    %v403 = vadd.f32 %v283, %v402
    %v404 = vpop.f32.mrf.mxu0
    %405 = vmatprep.mubr.bf16.mxu0 0
    %406 = vmatmul.mubr.bf16.gmra.mxu0 %v259
    %v407 = vpop.f32.mrf.mxu0
    %v408 = vadd.f32 %v283, %v407
    %v409 = vpop.f32.mrf.mxu0
    %v410 = vpop.f32.mrf.mxu0
    %v411 = vadd.f32 %v283, %v410
    %v412 = vpop.f32.mrf.mxu0
    %413 = vmatprep.mubr.bf16.mxu0 0
    %414 = vmatmul.mubr.bf16.gmra.mxu0 %v260
    %v415 = vpop.f32.mrf.mxu0
    %v416 = vadd.f32 %v283, %v415
    %v417 = vpop.f32.mrf.mxu0
    %v418 = vpop.f32.mrf.mxu0
    %v419 = vadd.f32 %v283, %v418
    %v420 = vpop.f32.mrf.mxu0
    %421 = vmatprep.mubr.bf16.mxu0 0
    %422 = vmatmul.mubr.bf16.gmra.mxu0 %v261
    %v423 = vpop.f32.mrf.mxu0
    %v424 = vadd.f32 %v283, %v423
    %v425 = vpop.f32.mrf.mxu0
    %v426 = vpop.f32.mrf.mxu0
    %v427 = vadd.f32 %v283, %v426
    %v428 = vpop.f32.mrf.mxu0
    %429 = vdwg.mxu0
    %v430 = vmax.f32 %v368, 0.0
    %v431 = vmax.f32 %v371, 0.0
    %v432 = vmax.f32 %v376, 0.0
    %v433 = vmax.f32 %v379, 0.0
    %v434 = vmax.f32 %v384, 0.0
    %v435 = vmax.f32 %v387, 0.0
    %v436 = vmax.f32 %v392, 0.0
    %v437 = vmax.f32 %v395, 0.0
    %v438 = vmax.f32 %v400, 0.0
    %v439 = vmax.f32 %v403, 0.0
    %v440 = vmax.f32 %v408, 0.0
    %v441 = vmax.f32 %v411, 0.0
    %v442 = vmax.f32 %v416, 0.0
    %v443 = vmax.f32 %v419, 0.0
    %v444 = vmax.f32 %v424, 0.0
    %v445 = vmax.f32 %v427, 0.0
    %v446 = vpack.c.bf16 %v431, %v430
    %v447 = vpack.c.bf16 %v433, %v432
    %v448 = vpack.c.bf16 %v435, %v434
    %v449 = vpack.c.bf16 %v437, %v436
    %v450 = vpack.c.bf16 %v439, %v438
    %v451 = vpack.c.bf16 %v441, %v440
    %v452 = vpack.c.bf16 %v443, %v442
    %v453 = vpack.c.bf16 %v445, %v444
    %v454 = vld [vmem:[%s5] sm:$0x1]
    %s455 = sld [smem:[#allocation2]]
    %v456 = vstv %s455
    %457 = vmatprep.subr.bf16.mxu0 0
    %458 = vmatpush1.bf16.xpose.msra.mxu0 %v453
    %459 = vmatprep.subr.bf16.mxu0 0
    %460 = vmatpush1.bf16.xpose.msra.mxu0 %v452
    %461 = vmatprep.subr.bf16.mxu0 0
    %462 = vmatpush1.bf16.xpose.msra.mxu0 %v451
    %463 = vmatprep.subr.bf16.mxu0 0
    %464 = vmatpush1.bf16.xpose.msra.mxu0 %v450
    %465 = vmatprep.subr.bf16.mxu0 0
    %466 = vmatpush1.bf16.xpose.msra.mxu0 %v449
    %467 = vmatprep.subr.bf16.mxu0 0
    %468 = vmatpush1.bf16.xpose.msra.mxu0 %v448
    %469 = vmatprep.subr.bf16.mxu0 0
    %470 = vmatpush1.bf16.xpose.msra.mxu0 %v447
    %471 = vmatprep.subr.bf16.mxu0 0
    %472 = vmatpush1.bf16.xpose.msra.mxu0 %v446
    %473 = vmatprep.subr.bf16.mxu0 0
    %474 = vmatpush2.bf16.xpose.msra.mxu0 0
    %475 = vmatprep.subr.bf16.mxu0 0
    %476 = vmatpush2.bf16.xpose.msra.mxu0 0
    %477 = vmatprep.subr.bf16.mxu0 0
    %478 = vmatpush2.bf16.xpose.msra.mxu0 0
    %479 = vmatprep.subr.bf16.mxu0 0
    %480 = vmatpush2.bf16.xpose.msra.mxu0 0
    %481 = vmatprep.subr.bf16.mxu0 0
    %482 = vmatpush2.bf16.xpose.msra.mxu0 0
    %483 = vmatprep.subr.bf16.mxu0 0
    %484 = vmatpush2.bf16.xpose.msra.mxu0 0
    %485 = vmatprep.subr.bf16.mxu0 0
    %486 = vmatpush2.bf16.xpose.msra.mxu0 0
    %487 = vmatprep.subr.bf16.mxu0 0
    %488 = vmatpush2.bf16.xpose.msra.mxu0 0
    %489 = vmatprep.mubr.bf16.mxu0 0
    %490 = vmatmul.mubr.bf16.gmra.mxu0 %v454
    %v491 = vpop.f32.mrf.mxu0
    %v492 = vadd.f32 %v456, %v491
    %v493 = vpop.f32.mrf.mxu0
    %v494 = vpop.f32.mrf.mxu0
    %v495 = vpop.f32.mrf.mxu0
    %496 = vdwg.mxu0
    %497 = vst [vmem:[%s7] sm:$0x1] %v492
    // Predicated region
    $region42: #{larp_mlp_forward.1} parent=1 // pred_check
      _
    $region43: #{larp_mlp_forward.1} parent=1 // pred_check_branch
      %499 = sbr.rel (0) target = $region45
    $region44: #{larp_mlp_forward.1} parent=1 // pred_region
      _
    $region45: #{larp_mlp_forward.1} parent=1 // pred_fallthru
      _
    // Predicated region
    $region46: #{larp_mlp_forward.1} parent=1 // pred_check
      _
    $region47: #{larp_mlp_forward.1} parent=1 // pred_check_branch
      %501 = sbr.rel (0) target = $region49
    $region48: #{larp_mlp_forward.1} parent=1 // pred_region
      _
    $region49: #{larp_mlp_forward.1} parent=1 // pred_fallthru
      _
    %502 = vsyncpa [#allocation4], 1
    %503 = vsyncpa [#allocation6], 1

</llo_original>
